<compile_context>
chip_gen: v5e
topology: v5e:2x2
jax: 0.10.0
libtpu: 0.0.40
codegen_flags: <defaults>
</compile_context>

<pallas_src>
import jax
import jax.numpy as jnp
from jax.experimental import pallas as pl
from jax.experimental.pallas import tpu as pltpu

_LANES = 128       # vreg lane width: pad the action dim to this for unmasked stores
_SUBLANES = 8      # sublane granularity for the batch tile
_MAX_TILE_B = 4096 # double-buffered (state + padded output) tile ~5 MiB << 16 MiB v5e scoped VMEM


def _qnet_kernel(x_ref, w1_ref, b1_ref, w2_ref, b2_ref, w3_ref, b3_ref, out_ref):
    """Fused 3-layer MLP forward for one batch tile; all weights VMEM-resident."""
    x = x_ref[...]

    h1 = jnp.dot(x, w1_ref[...], preferred_element_type=jnp.float32) + b1_ref[...]
    h1 = jnp.maximum(h1, 0.0)

    h2 = jnp.dot(h1, w2_ref[...], preferred_element_type=jnp.float32) + b2_ref[...]
    h2 = jnp.maximum(h2, 0.0)

    q = jnp.dot(h2, w3_ref[...], preferred_element_type=jnp.float32) + b3_ref[...]
    out_ref[...] = q.astype(out_ref.dtype)


def _round_up(x, m):
    return ((x + m - 1) // m) * m


def _choose_tiling(batch):
    """Return (padded_batch, tile_b, num_tiles).

    As few grid steps as possible (the kernel is step-overhead bound at these
    shapes), but >= 2 steps once the batch allows it so a 2-TC chip (v7x) can
    shard the 'parallel' axis. Tile size is capped so double-buffered tiles
    stay far below every generation's scoped-VMEM default.
    """
    num_tiles = max(1, -(-batch // _MAX_TILE_B))      # ceil div
    if num_tiles == 1 and batch >= 2 * _SUBLANES:
        num_tiles = 2
    tile_b = _round_up(-(-batch // num_tiles), _SUBLANES)
    return tile_b * num_tiles, tile_b, num_tiles


@jax.jit
def qnetwork_forward(state, params):
    """QNetwork forward: (B, state_size) -> (B, action_size) Q-values."""
    w1, b1 = params["w1"], params["b1"]
    w2, b2 = params["w2"], params["b2"]
    w3, b3 = params["w3"], params["b3"]

    B, S = state.shape
    H1 = w1.shape[1]
    H2 = w2.shape[1]
    A = w3.shape[1]

    # Lane-dense output: zero-pad w3/b3 columns to a multiple of 128 lanes.
    A_pad = _round_up(A, _LANES)
    if A_pad != A:
        w3p = jnp.zeros((H2, A_pad), w3.dtype).at[:, :A].set(w3)
        b3p = jnp.zeros((1, A_pad), b3.dtype).at[:, :A].set(b3)
    else:
        w3p, b3p = w3, b3

    # Collapse the grid into 1-2 big batch tiles (sublane-aligned).
    B_pad, tile_b, num_tiles = _choose_tiling(B)
    if B_pad != B:
        state_in = jnp.zeros((B_pad, S), state.dtype).at[:B, :].set(state)
    else:
        state_in = state

    flops = 2 * B_pad * (S * H1 + H1 * H2 + H2 * A_pad)
    bytes_accessed = 4 * (B_pad * S + B_pad * A_pad
                          + S * H1 + H1 + H1 * H2 + H2 + H2 * A_pad + A_pad)

    out = pl.pallas_call(
        _qnet_kernel,
        out_shape=jax.ShapeDtypeStruct((B_pad, A_pad), state.dtype),
        grid=(num_tiles,),
        in_specs=[
            pl.BlockSpec((tile_b, S), lambda i: (i, 0)),   # state tile (only per-step stream)
            pl.BlockSpec((S, H1), lambda i: (0, 0)),       # w1 (constant block)
            pl.BlockSpec((1, H1), lambda i: (0, 0)),       # b1
            pl.BlockSpec((H1, H2), lambda i: (0, 0)),      # w2
            pl.BlockSpec((1, H2), lambda i: (0, 0)),       # b2
            pl.BlockSpec((H2, A_pad), lambda i: (0, 0)),   # w3 (lane-padded)
            pl.BlockSpec((1, A_pad), lambda i: (0, 0)),    # b3 (lane-padded)
        ],
        out_specs=pl.BlockSpec((tile_b, A_pad), lambda i: (i, 0)),
        compiler_params=pltpu.CompilerParams(
            dimension_semantics=("parallel",),       # 2 steps -> both TCs on v7x
            vmem_limit_bytes=32 * 1024 * 1024,       # explicit, safe on v5e/v6e/v7x
        ),
        cost_estimate=pl.CostEstimate(
            flops=flops, transcendentals=0, bytes_accessed=bytes_accessed),
    )(state_in, w1, b1, w2, b2, w3p, b3p)

    # Slice padded batch rows / padded action lanes back off.
    return out[:B, :A]


def init_qnetwork_params(key, state_size, action_size, fc_units):
    """Init mimicking PyTorch nn.Linear default (U(-1/sqrt(in), 1/sqrt(in)))."""
    dims = [state_size, fc_units[0], fc_units[1], action_size]
    names = ["1", "2", "3"]
    params = {}
    for n, (d_in, d_out) in zip(names, zip(dims[:-1], dims[1:])):
        key, kw, kb = jax.random.split(key, 3)
        bound = 1.0 / (d_in ** 0.5)
        params[f"w{n}"] = jax.random.uniform(
            kw, (d_in, d_out), jnp.float32, minval=-bound, maxval=bound)
        params[f"b{n}"] = jax.random.uniform(
            kb, (1, d_out), jnp.float32, minval=-bound, maxval=bound)
    return params


def qnetwork_reference(state, params):
    """Pure-JAX reference for correctness check."""
    h1 = jnp.maximum(state @ params["w1"] + params["b1"], 0.0)
    h2 = jnp.maximum(h1 @ params["w2"] + params["b2"], 0.0)
    return h2 @ params["w3"] + params["b3"]


if __name__ == "__main__":
    # Small shapes consistent with QNetwork(state_size, action_size, seed, fc_units)
    batch = 16
    state_size = 16
    action_size = 4
    fc_units = (32, 32)

    key = jax.random.PRNGKey(0)
    key, k_state = jax.random.split(key)
    params = init_qnetwork_params(key, state_size, action_size, fc_units)
    state = jax.random.normal(k_state, (batch, state_size), jnp.float32)

    out = qnetwork_forward(state, params)
    out = jax.block_until_ready(out)

    ref = qnetwork_reference(state, params)
    assert out.shape == (batch, action_size), out.shape
    assert jnp.allclose(out, ref, atol=1e-5, rtol=1e-5), "mismatch vs reference"

    print("KERNEL_OK")
</pallas_src>

<mosaic_0001>
module attributes {stable_mosaic.version = 11 : i64} {
  func.func @_qnet_kernel(%arg0: i32, %arg1: memref<8x16xf32, #tpu.memory_space<vmem>>, %arg2: memref<16x32xf32, #tpu.memory_space<vmem>>, %arg3: memref<1x32xf32, #tpu.memory_space<vmem>>, %arg4: memref<32x32xf32, #tpu.memory_space<vmem>>, %arg5: memref<1x32xf32, #tpu.memory_space<vmem>>, %arg6: memref<32x128xf32, #tpu.memory_space<vmem>>, %arg7: memref<1x128xf32, #tpu.memory_space<vmem>>, %arg8: memref<8x128xf32, #tpu.memory_space<vmem>>) attributes {dimension_semantics = [#tpu.dimension_semantics<parallel>], iteration_bounds = array<i64: 2>, scalar_prefetch = 0 : i64, scratch_operands = 0 : i64, tpu.core_type = #tpu.core_type<tc>, window_params = [{transform_indices = @transform_0, window_bounds = array<i64: 8, 16>}, {pipeline_mode = #tpu.pipeline_mode<synchronous>, transform_indices = @transform_1, window_bounds = array<i64: 16, 32>}, {pipeline_mode = #tpu.pipeline_mode<synchronous>, transform_indices = @transform_2, window_bounds = array<i64: 1, 32>}, {pipeline_mode = #tpu.pipeline_mode<synchronous>, transform_indices = @transform_3, window_bounds = array<i64: 32, 32>}, {pipeline_mode = #tpu.pipeline_mode<synchronous>, transform_indices = @transform_4, window_bounds = array<i64: 1, 32>}, {pipeline_mode = #tpu.pipeline_mode<synchronous>, transform_indices = @transform_5, window_bounds = array<i64: 32, 128>}, {pipeline_mode = #tpu.pipeline_mode<synchronous>, transform_indices = @transform_6, window_bounds = array<i64: 1, 128>}, {transform_indices = @transform_7, window_bounds = array<i64: 8, 128>}]} {
    %c0 = arith.constant 0 : index
    %c0_0 = arith.constant 0 : index
    %0 = vector.load %arg1[%c0, %c0_0] : memref<8x16xf32, #tpu.memory_space<vmem>>, vector<8x16xf32>
    %c0_1 = arith.constant 0 : index
    %c0_2 = arith.constant 0 : index
    %1 = vector.load %arg2[%c0_1, %c0_2] : memref<16x32xf32, #tpu.memory_space<vmem>>, vector<16x32xf32>
    %cst = arith.constant dense<0.000000e+00> : vector<8x32xf32>
    %2 = tpu.matmul %0, %1, %cst {dimension_numbers = #tpu.dot_dimension_numbers<[1], [0], [0], [1], [0, 0, 1, 1], [], []>} : vector<8x16xf32>, vector<16x32xf32>, vector<8x32xf32> -> vector<8x32xf32>
    %c0_3 = arith.constant 0 : index
    %c0_4 = arith.constant 0 : index
    %3 = vector.load %arg3[%c0_3, %c0_4] : memref<1x32xf32, #tpu.memory_space<vmem>>, vector<1x32xf32>
    %4 = vector.broadcast %3 : vector<1x32xf32> to vector<8x32xf32>
    %5 = arith.addf %2, %4 : vector<8x32xf32>
    %cst_5 = arith.constant 0.000000e+00 : f32
    %6 = vector.broadcast %cst_5 : f32 to vector<8x32xf32>
    %7 = arith.maximumf %5, %6 : vector<8x32xf32>
    %c0_6 = arith.constant 0 : index
    %c0_7 = arith.constant 0 : index
    %8 = vector.load %arg4[%c0_6, %c0_7] : memref<32x32xf32, #tpu.memory_space<vmem>>, vector<32x32xf32>
    %cst_8 = arith.constant dense<0.000000e+00> : vector<8x32xf32>
    %9 = tpu.matmul %7, %8, %cst_8 {dimension_numbers = #tpu.dot_dimension_numbers<[1], [0], [0], [1], [0, 0, 1, 1], [], []>} : vector<8x32xf32>, vector<32x32xf32>, vector<8x32xf32> -> vector<8x32xf32>
    %c0_9 = arith.constant 0 : index
    %c0_10 = arith.constant 0 : index
    %10 = vector.load %arg5[%c0_9, %c0_10] : memref<1x32xf32, #tpu.memory_space<vmem>>, vector<1x32xf32>
    %11 = vector.broadcast %10 : vector<1x32xf32> to vector<8x32xf32>
    %12 = arith.addf %9, %11 : vector<8x32xf32>
    %cst_11 = arith.constant 0.000000e+00 : f32
    %13 = vector.broadcast %cst_11 : f32 to vector<8x32xf32>
    %14 = arith.maximumf %12, %13 : vector<8x32xf32>
    %c0_12 = arith.constant 0 : index
    %c0_13 = arith.constant 0 : index
    %15 = vector.load %arg6[%c0_12, %c0_13] : memref<32x128xf32, #tpu.memory_space<vmem>>, vector<32x128xf32>
    %cst_14 = arith.constant dense<0.000000e+00> : vector<8x128xf32>
    %16 = tpu.matmul %14, %15, %cst_14 {dimension_numbers = #tpu.dot_dimension_numbers<[1], [0], [0], [1], [0, 0, 1, 1], [], []>} : vector<8x32xf32>, vector<32x128xf32>, vector<8x128xf32> -> vector<8x128xf32>
    %c0_15 = arith.constant 0 : index
    %c0_16 = arith.constant 0 : index
    %17 = vector.load %arg7[%c0_15, %c0_16] : memref<1x128xf32, #tpu.memory_space<vmem>>, vector<1x128xf32>
    %18 = vector.broadcast %17 : vector<1x128xf32> to vector<8x128xf32>
    %19 = arith.addf %16, %18 : vector<8x128xf32>
    %c0_17 = arith.constant 0 : index
    %c0_18 = arith.constant 0 : index
    %20 = vector.load %arg8[%c0_17, %c0_18] : memref<8x128xf32, #tpu.memory_space<vmem>>, vector<8x128xf32>
    tpu.vector_store %arg8[%c0_17, %c0_18], %19 {strides = array<i32>} : memref<8x128xf32, #tpu.memory_space<vmem>>, vector<8x128xf32>,
    return
  }
  func.func @transform_0(%arg0: i32) -> (i32, i32) {
    %c0_i32 = arith.constant 0 : i32
    %c0_i32_0 = arith.constant 0 : i32
    return %arg0, %c0_i32 : i32, i32
  }
  func.func @transform_1(%arg0: i32) -> (i32, i32) {
    %c0_i32 = arith.constant 0 : i32
    %c0_i32_0 = arith.constant 0 : i32
    %c0_i32_1 = arith.constant 0 : i32
    return %c0_i32, %c0_i32_0 : i32, i32
  }
  func.func @transform_2(%arg0: i32) -> (i32, i32) {
    %c0_i32 = arith.constant 0 : i32
    %c0_i32_0 = arith.constant 0 : i32
    %c0_i32_1 = arith.constant 0 : i32
    return %c0_i32, %c0_i32_0 : i32, i32
  }
  func.func @transform_3(%arg0: i32) -> (i32, i32) {
    %c0_i32 = arith.constant 0 : i32
    %c0_i32_0 = arith.constant 0 : i32
    %c0_i32_1 = arith.constant 0 : i32
    return %c0_i32, %c0_i32_0 : i32, i32
  }
  func.func @transform_4(%arg0: i32) -> (i32, i32) {
    %c0_i32 = arith.constant 0 : i32
    %c0_i32_0 = arith.constant 0 : i32
    %c0_i32_1 = arith.constant 0 : i32
    return %c0_i32, %c0_i32_0 : i32, i32
  }
  func.func @transform_5(%arg0: i32) -> (i32, i32) {
    %c0_i32 = arith.constant 0 : i32
    %c0_i32_0 = arith.constant 0 : i32
    %c0_i32_1 = arith.constant 0 : i32
    return %c0_i32, %c0_i32_0 : i32, i32
  }
  func.func @transform_6(%arg0: i32) -> (i32, i32) {
    %c0_i32 = arith.constant 0 : i32
    %c0_i32_0 = arith.constant 0 : i32
    %c0_i32_1 = arith.constant 0 : i32
    return %c0_i32, %c0_i32_0 : i32, i32
  }
  func.func @transform_7(%arg0: i32) -> (i32, i32) {
    %c0_i32 = arith.constant 0 : i32
    %c0_i32_0 = arith.constant 0 : i32
    return %arg0, %c0_i32 : i32, i32
  }
}

</mosaic_0001>

<llo_original>
// kernel: qnetwork_forward.1
$region0: #{qnetwork_forward.1}
  #allocation0 [shape = 'u32[]', space=smem, size = 0x4, offset = 0x4, fixed_abs, tag = 'smem constant byte address 0x4 - core index']
  #allocation1 [shape = 'u32[72,128]{1,0:T(1,128)}', space=vmem, size = 0x9000, scoped, tag = 'internal scratch']
  %s0 = inlined_call_operand.vmem [shape: f32[16,16], index: 0, kind: input, shape index: {}]
  %s1 = inlined_call_operand.vmem [shape: f32[16,32], index: 1, kind: input, shape index: {}]
  %s2 = inlined_call_operand.vmem [shape: f32[1,32], index: 2, kind: input, shape index: {}]
  %s3 = inlined_call_operand.vmem [shape: f32[32,32], index: 3, kind: input, shape index: {}]
  %s4 = inlined_call_operand.vmem [shape: f32[1,32], index: 4, kind: input, shape index: {}]
  %s5 = inlined_call_operand.vmem [shape: f32[32,128], index: 5, kind: input, shape index: {}]
  %s6 = inlined_call_operand.vmem [shape: f32[1,128], index: 6, kind: input, shape index: {}]
  %s7 = inlined_call_operand.vmem [shape: f32[16,128], index: 7, kind: output, shape index: {}]
  %s8 = sld [smem:[#allocation0]]
  $region61: #{qnetwork_forward.1} parent=0
    _
  %s10 = ssub.s32 1, %s8
  %s11 = scalar_select 0, %s10, %s8
  loop: start=0, step=1, limit=4
  $region2: #{qnetwork_forward.1} parent=0 // loop_pre_header
    _
  $region3: #{qnetwork_forward.1} parent=0 // loop_header
    %s13 = sphi 0, %s17
    %p14 = scmp.ge.s32.totalorder %s13, 4
    %s23 = sphi 0, %s25
    %s26 = sphi 0, %s23
    %s27 = sphi 0, %s26
    %s43 = sphi 0, %s27
    %s47 = sphi 0, %s47
    %s49 = sphi 0, %s47
    %s50 = sphi 0, %s49
    %s64 = sphi 0, %s50
    %s68 = sphi 0, %s68
    %s70 = sphi 0, %s68
    %s71 = sphi 0, %s70
    %s85 = sphi 0, %s71
    %s89 = sphi 0, %s89
    %s91 = sphi 0, %s89
    %s92 = sphi 0, %s91
    %s106 = sphi 0, %s92
    %s110 = sphi 0, %s110
    %s112 = sphi 0, %s110
    %s113 = sphi 0, %s112
    %s127 = sphi 0, %s113
    %s131 = sphi 0, %s131
    %s133 = sphi 0, %s131
    %s134 = sphi 0, %s133
    %s148 = sphi 0, %s134
    %s152 = sphi 0, %s152
    %s154 = sphi 0, %s152
    %s155 = sphi 0, %s154
    %s169 = sphi 0, %s155
    %s175 = sphi 0, %s177
    %s178 = sphi 0, %s175
    %s179 = sphi 0, %s178
    %s195 = sphi 0, %s179
  $region4: #{qnetwork_forward.1} parent=0 // loop_header_branch
    %16 = sbr.rel (%p14) target = $region8
  $region5: #{qnetwork_forward.1} parent=0 // loop_body
    %s18 = ssub.s32 %s13, 1
    %s19 = ssub.s32 %s13, 2
    %s20 = sadd.s32 %s13, 1
    %s21 = ssub.s32 %s13, %s20
    %p22 = scmp.eq.s32.totalorder %s21, 0
    %s24 = sadd.s32 %s23, 1
    %s25 = scalar_select %p22, %s23, %s24
    %p28 = pneg %p22
    %p29 = scmp.eq.s32.totalorder %s13, 1
    %p30 = por %p28, %p29
    %p31 = scmp.ne.s32.totalorder %s23, %s26
    %p32 = scmp.eq.s32.totalorder %s13, 0
    %p33 = por %p31, %p32
    %p34 = scmp.ne.s32.totalorder %s23, %s26
    %p35 = scmp.eq.s32.totalorder %s18, 1
    %p36 = por %p34, %p35
    %p37 = scmp.ne.s32.totalorder %s26, %s27
    %p38 = scmp.eq.s32.totalorder %s18, 0
    %p39 = por %p37, %p38
    %p40 = scmp.ne.s32.totalorder %s26, %s27
    %p41 = scmp.eq.s32.totalorder %s19, 1
    %p42 = por %p40, %p41
    %p44 = scmp.ne.s32.totalorder %s27, %s43
    %p45 = scmp.eq.s32.totalorder %s19, 0
    %p46 = por %p44, %p45
    %s48 = sadd.s32 %s47, 1
    %p51 = scmp.eq.s32.totalorder %s13, 1
    %p52 = scmp.ne.s32.totalorder %s47, %s49
    %p53 = scmp.eq.s32.totalorder %s13, 0
    %p54 = por %p52, %p53
    %p55 = scmp.ne.s32.totalorder %s47, %s49
    %p56 = scmp.eq.s32.totalorder %s18, 1
    %p57 = por %p55, %p56
    %p58 = scmp.ne.s32.totalorder %s49, %s50
    %p59 = scmp.eq.s32.totalorder %s18, 0
    %p60 = por %p58, %p59
    %p61 = scmp.ne.s32.totalorder %s49, %s50
    %p62 = scmp.eq.s32.totalorder %s19, 1
    %p63 = por %p61, %p62
    %p65 = scmp.ne.s32.totalorder %s50, %s64
    %p66 = scmp.eq.s32.totalorder %s19, 0
    %p67 = por %p65, %p66
    %s69 = sadd.s32 %s68, 1
    %p72 = scmp.eq.s32.totalorder %s13, 1
    %p73 = scmp.ne.s32.totalorder %s68, %s70
    %p74 = scmp.eq.s32.totalorder %s13, 0
    %p75 = por %p73, %p74
    %p76 = scmp.ne.s32.totalorder %s68, %s70
    %p77 = scmp.eq.s32.totalorder %s18, 1
    %p78 = por %p76, %p77
    %p79 = scmp.ne.s32.totalorder %s70, %s71
    %p80 = scmp.eq.s32.totalorder %s18, 0
    %p81 = por %p79, %p80
    %p82 = scmp.ne.s32.totalorder %s70, %s71
    %p83 = scmp.eq.s32.totalorder %s19, 1
    %p84 = por %p82, %p83
    %p86 = scmp.ne.s32.totalorder %s71, %s85
    %p87 = scmp.eq.s32.totalorder %s19, 0
    %p88 = por %p86, %p87
    %s90 = sadd.s32 %s89, 1
    %p93 = scmp.eq.s32.totalorder %s13, 1
    %p94 = scmp.ne.s32.totalorder %s89, %s91
    %p95 = scmp.eq.s32.totalorder %s13, 0
    %p96 = por %p94, %p95
    %p97 = scmp.ne.s32.totalorder %s89, %s91
    %p98 = scmp.eq.s32.totalorder %s18, 1
    %p99 = por %p97, %p98
    %p100 = scmp.ne.s32.totalorder %s91, %s92
    %p101 = scmp.eq.s32.totalorder %s18, 0
    %p102 = por %p100, %p101
    %p103 = scmp.ne.s32.totalorder %s91, %s92
    %p104 = scmp.eq.s32.totalorder %s19, 1
    %p105 = por %p103, %p104
    %p107 = scmp.ne.s32.totalorder %s92, %s106
    %p108 = scmp.eq.s32.totalorder %s19, 0
    %p109 = por %p107, %p108
    %s111 = sadd.s32 %s110, 1
    %p114 = scmp.eq.s32.totalorder %s13, 1
    %p115 = scmp.ne.s32.totalorder %s110, %s112
    %p116 = scmp.eq.s32.totalorder %s13, 0
    %p117 = por %p115, %p116
    %p118 = scmp.ne.s32.totalorder %s110, %s112
    %p119 = scmp.eq.s32.totalorder %s18, 1
    %p120 = por %p118, %p119
    %p121 = scmp.ne.s32.totalorder %s112, %s113
    %p122 = scmp.eq.s32.totalorder %s18, 0
    %p123 = por %p121, %p122
    %p124 = scmp.ne.s32.totalorder %s112, %s113
    %p125 = scmp.eq.s32.totalorder %s19, 1
    %p126 = por %p124, %p125
    %p128 = scmp.ne.s32.totalorder %s113, %s127
    %p129 = scmp.eq.s32.totalorder %s19, 0
    %p130 = por %p128, %p129
    %s132 = sadd.s32 %s131, 1
    %p135 = scmp.eq.s32.totalorder %s13, 1
    %p136 = scmp.ne.s32.totalorder %s131, %s133
    %p137 = scmp.eq.s32.totalorder %s13, 0
    %p138 = por %p136, %p137
    %p139 = scmp.ne.s32.totalorder %s131, %s133
    %p140 = scmp.eq.s32.totalorder %s18, 1
    %p141 = por %p139, %p140
    %p142 = scmp.ne.s32.totalorder %s133, %s134
    %p143 = scmp.eq.s32.totalorder %s18, 0
    %p144 = por %p142, %p143
    %p145 = scmp.ne.s32.totalorder %s133, %s134
    %p146 = scmp.eq.s32.totalorder %s19, 1
    %p147 = por %p145, %p146
    %p149 = scmp.ne.s32.totalorder %s134, %s148
    %p150 = scmp.eq.s32.totalorder %s19, 0
    %p151 = por %p149, %p150
    %s153 = sadd.s32 %s152, 1
    %p156 = scmp.eq.s32.totalorder %s13, 1
    %p157 = scmp.ne.s32.totalorder %s152, %s154
    %p158 = scmp.eq.s32.totalorder %s13, 0
    %p159 = por %p157, %p158
    %p160 = scmp.ne.s32.totalorder %s152, %s154
    %p161 = scmp.eq.s32.totalorder %s18, 1
    %p162 = por %p160, %p161
    %p163 = scmp.ne.s32.totalorder %s154, %s155
    %p164 = scmp.eq.s32.totalorder %s18, 0
    %p165 = por %p163, %p164
    %p166 = scmp.ne.s32.totalorder %s154, %s155
    %p167 = scmp.eq.s32.totalorder %s19, 1
    %p168 = por %p166, %p167
    %p170 = scmp.ne.s32.totalorder %s155, %s169
    %p171 = scmp.eq.s32.totalorder %s19, 0
    %p172 = por %p170, %p171
    %s173 = ssub.s32 %s13, %s20
    %p174 = scmp.eq.s32.totalorder %s173, 0
    %s176 = sadd.s32 %s175, 1
    %s177 = scalar_select %p174, %s175, %s176
    %p180 = pneg %p174
    %p181 = scmp.eq.s32.totalorder %s13, 1
    %p182 = por %p180, %p181
    %p183 = scmp.ne.s32.totalorder %s175, %s178
    %p184 = scmp.eq.s32.totalorder %s13, 0
    %p185 = por %p183, %p184
    %p186 = scmp.ne.s32.totalorder %s175, %s178
    %p187 = scmp.eq.s32.totalorder %s18, 1
    %p188 = por %p186, %p187
    %p189 = scmp.ne.s32.totalorder %s178, %s179
    %p190 = scmp.eq.s32.totalorder %s18, 0
    %p191 = por %p189, %p190
    %p192 = scmp.ne.s32.totalorder %s178, %s179
    %p193 = scmp.eq.s32.totalorder %s19, 1
    %p194 = por %p192, %p193
    %p196 = scmp.ne.s32.totalorder %s179, %s195
    %p197 = scmp.eq.s32.totalorder %s19, 0
    %p198 = por %p196, %p197
    %p199 = scmp.le.s32.totalorder 1, %s13
    %p200 = scmp.lt.s32.totalorder %s13, 3
    %p201 = pnand %p199, %p200
    %p202 = pneg %p201
    // Predicated region
    $region9: #{qnetwork_forward.1} parent=5 // pred_check
      _
    $region10: #{qnetwork_forward.1} parent=5 // pred_check_branch
      %204 = sbr.rel (%p201) target = $region12
    $region11: #{qnetwork_forward.1} parent=5 // pred_region
      %s205 = ssub.s32 %s13, 1
      // Predicated region
      $region13: #{qnetwork_forward.1} parent=11 // pred_check
        %p206 = pneg %p60
      $region14: #{qnetwork_forward.1} parent=11 // pred_check_branch
        %208 = sbr.rel (%p206) target = $region16
      $region15: #{qnetwork_forward.1} parent=11 // pred_region
        _
      $region16: #{qnetwork_forward.1} parent=11 // pred_fallthru
        _
      // Predicated region
      $region17: #{qnetwork_forward.1} parent=11 // pred_check
        %p209 = pneg %p81
      $region18: #{qnetwork_forward.1} parent=11 // pred_check_branch
        %211 = sbr.rel (%p209) target = $region20
      $region19: #{qnetwork_forward.1} parent=11 // pred_region
        _
      $region20: #{qnetwork_forward.1} parent=11 // pred_fallthru
        _
      // Predicated region
      $region21: #{qnetwork_forward.1} parent=11 // pred_check
        %p212 = pneg %p102
      $region22: #{qnetwork_forward.1} parent=11 // pred_check_branch
        %214 = sbr.rel (%p212) target = $region24
      $region23: #{qnetwork_forward.1} parent=11 // pred_region
        _
      $region24: #{qnetwork_forward.1} parent=11 // pred_fallthru
        _
      // Predicated region
      $region25: #{qnetwork_forward.1} parent=11 // pred_check
        %p215 = pneg %p123
      $region26: #{qnetwork_forward.1} parent=11 // pred_check_branch
        %217 = sbr.rel (%p215) target = $region28
      $region27: #{qnetwork_forward.1} parent=11 // pred_region
        _
      $region28: #{qnetwork_forward.1} parent=11 // pred_fallthru
        _
      // Predicated region
      $region29: #{qnetwork_forward.1} parent=11 // pred_check
        %p218 = pneg %p144
      $region30: #{qnetwork_forward.1} parent=11 // pred_check_branch
        %220 = sbr.rel (%p218) target = $region32
      $region31: #{qnetwork_forward.1} parent=11 // pred_region
        _
      $region32: #{qnetwork_forward.1} parent=11 // pred_fallthru
        _
      // Predicated region
      $region33: #{qnetwork_forward.1} parent=11 // pred_check
        %p221 = pneg %p165
      $region34: #{qnetwork_forward.1} parent=11 // pred_check_branch
        %223 = sbr.rel (%p221) target = $region36
      $region35: #{qnetwork_forward.1} parent=11 // pred_region
        _
      $region36: #{qnetwork_forward.1} parent=11 // pred_fallthru
        _
    $region12: #{qnetwork_forward.1} parent=5 // pred_fallthru
      _
    %p224 = scmp.lt.s32.totalorder %s13, 2
    // Predicated region
    $region37: #{qnetwork_forward.1} parent=5 // pred_check
      %p225 = pneg %p224
    $region38: #{qnetwork_forward.1} parent=5 // pred_check_branch
      %227 = sbr.rel (%p225) target = $region40
    $region39: #{qnetwork_forward.1} parent=5 // pred_region
      // Predicated region
      $region41: #{qnetwork_forward.1} parent=39 // pred_check
        %p228 = pneg %p33
      $region42: #{qnetwork_forward.1} parent=39 // pred_check_branch
        %230 = sbr.rel (%p228) target = $region44
      $region43: #{qnetwork_forward.1} parent=39 // pred_region
        %p231 = scmp.lt.s32.totalorder %s13, 1
        %s232 = scalar_select %p231, %s13, 1
        %s233 = smul.addr %s232, 8
        %s234 = scalar_lea.vmem %s0, %s233
      $region44: #{qnetwork_forward.1} parent=39 // pred_fallthru
        _
    $region40: #{qnetwork_forward.1} parent=5 // pred_fallthru
      _
    %p235 = scmp.le.s32.totalorder 1, %s13
    %p236 = scmp.lt.s32.totalorder %s13, 3
    %p237 = pnand %p235, %p236
    %p238 = pneg %p237
    // Predicated region
    $region45: #{qnetwork_forward.1} parent=5 // pred_check
      _
    $region46: #{qnetwork_forward.1} parent=5 // pred_check_branch
      %240 = sbr.rel (%p237) target = $region48
    $region47: #{qnetwork_forward.1} parent=5 // pred_region
      %s241 = ssub.s32 %s13, 1
      %p242 = scmp.lt.s32.totalorder %s18, 1
      %s243 = scalar_select %p242, %s18, 1
      %s244 = smul.addr %s243, 8
      %s245 = scalar_lea.vmem %s0, %s244
      %p246 = pneg %p39
      %p247 = pneg %p36
      %p248 = pneg %p60
      %p249 = pneg %p57
      %p250 = pneg %p81
      %p251 = pneg %p78
      %p252 = pneg %p102
      %p253 = pneg %p99
      %p254 = pneg %p123
      %p255 = pneg %p120
      %p256 = pneg %p144
      %p257 = pneg %p141
      %p258 = pneg %p165
      %p259 = pneg %p162
      %p260 = pneg %p191
      %p261 = pneg %p188
      %p262 = scmp.lt.s32.totalorder %s18, 1
      %s263 = scalar_select %p262, %s18, 1
      %s264 = smul.addr %s263, 8
      %s265 = scalar_lea.vmem %s7, %s264
      %p266 = scmp.lt.s32.totalorder %s18, 1
      %s267 = scalar_select %p266, %s18, 1
      %s268 = smul.addr %s267, 8
      %s269 = scalar_lea.vmem %s0, %s268
      %p270 = scmp.lt.s32.totalorder %s18, 1
      %s271 = scalar_select %p270, %s18, 1
      %s272 = smul.addr %s271, 8
      %s273 = scalar_lea.vmem %s7, %s272
      %v274 = vld [vmem:[%s269] sm:$0xff]
      %v275 = vld [vmem:[%s1] sm:$0xff]
      %v276 = vld [vmem:[%s1 + $0x8] sm:$0xff]
      %v277 = vld [vmem:[%s2] sm:$0x1]
      %v279 = vperm.slane %v277, 0
      %vm281 = vcmask 130048
      %v283 = vsel %vm281, %v274, 0
      %285 = vmatpush.msra.mxu0 0.0
      %286 = vmatpush.msra.mxu0 0.0
      %287 = vmatpush.msra.mxu0 0.0
      %288 = vmatpush.msra.mxu0 0.0
      %289 = vmatpush.msra.mxu0 0.0
      %290 = vmatpush.msra.mxu0 0.0
      %291 = vmatpush.msra.mxu0 0.0
      %292 = vmatpush.msra.mxu0 0.0
      %293 = vmatpush.msra.mxu0 0.0
      %294 = vmatpush.msra.mxu0 0.0
      %295 = vmatpush.msra.mxu0 0.0
      %296 = vmatpush.msra.mxu0 0.0
      %297 = vmatpush.msra.mxu0 0.0
      %298 = vmatpush.msra.mxu0 0.0
      %299 = vmatpush.msra.mxu0 %v276
      %300 = vmatpush.msra.mxu0 %v275
      %301 = vmatmul.f32.gmra.mxu0 %v283
      %v302 = vpop.f32.mrf.mxu0
      %v303 = vadd.f32 %v279, %v302
      %304 = vdwg.mxu0
      %v305 = vmax.f32 %v303, 0.0
      %v306 = vld [vmem:[%s3] sm:$0xff]
      %v307 = vld [vmem:[%s3 + $0x8] sm:$0xff]
      %v308 = vld [vmem:[%s3 + $0x10] sm:$0xff]
      %v309 = vld [vmem:[%s3 + $0x18] sm:$0xff]
      %v310 = vld [vmem:[%s4] sm:$0x1]
      %v312 = vperm.slane %v310, 0
      %vm314 = vcmask 261120
      %v316 = vsel %vm314, %v305, 0
      %318 = vmatpush.msra.mxu0 0.0
      %319 = vmatpush.msra.mxu0 0.0
      %320 = vmatpush.msra.mxu0 0.0
      %321 = vmatpush.msra.mxu0 0.0
      %322 = vmatpush.msra.mxu0 0.0
      %323 = vmatpush.msra.mxu0 0.0
      %324 = vmatpush.msra.mxu0 0.0
      %325 = vmatpush.msra.mxu0 0.0
      %326 = vmatpush.msra.mxu0 0.0
      %327 = vmatpush.msra.mxu0 0.0
      %328 = vmatpush.msra.mxu0 0.0
      %329 = vmatpush.msra.mxu0 0.0
      %330 = vmatpush.msra.mxu0 %v309
      %331 = vmatpush.msra.mxu0 %v308
      %332 = vmatpush.msra.mxu0 %v307
      %333 = vmatpush.msra.mxu0 %v306
      %334 = vmatmul.f32.gmra.mxu0 %v316
      %v335 = vpop.f32.mrf.mxu0
      %v336 = vadd.f32 %v312, %v335
      %337 = vdwg.mxu0
      %v338 = vmax.f32 %v336, 0.0
      %v339 = vld [vmem:[%s5] sm:$0xff]
      %v340 = vld [vmem:[%s5 + $0x8] sm:$0xff]
      %v341 = vld [vmem:[%s5 + $0x10] sm:$0xff]
      %v342 = vld [vmem:[%s5 + $0x18] sm:$0xff]
      %v343 = vld [vmem:[%s6] sm:$0x1]
      %v345 = vperm.slane %v343, 0
      %v348 = vsel %vm314, %v338, 0
      %350 = vmatpush.msra.mxu0 0.0
      %351 = vmatpush.msra.mxu0 0.0
      %352 = vmatpush.msra.mxu0 0.0
      %353 = vmatpush.msra.mxu0 0.0
      %354 = vmatpush.msra.mxu0 0.0
      %355 = vmatpush.msra.mxu0 0.0
      %356 = vmatpush.msra.mxu0 0.0
      %357 = vmatpush.msra.mxu0 0.0
      %358 = vmatpush.msra.mxu0 0.0
      %359 = vmatpush.msra.mxu0 0.0
      %360 = vmatpush.msra.mxu0 0.0
      %361 = vmatpush.msra.mxu0 0.0
      %362 = vmatpush.msra.mxu0 %v342
      %363 = vmatpush.msra.mxu0 %v341
      %364 = vmatpush.msra.mxu0 %v340
      %365 = vmatpush.msra.mxu0 %v339
      %366 = vmatmul.f32.gmra.mxu0 %v348
      %v367 = vpop.f32.mrf.mxu0
      %v368 = vadd.f32 %v345, %v367
      %369 = vdwg.mxu0
      %370 = vst [vmem:[%s273] sm:$0xff] %v368
      %p371 = scmp.lt.s32.totalorder %s18, 1
      %s372 = scalar_select %p371, %s18, 1
      %s373 = smul.addr %s372, 8
      %s374 = scalar_lea.vmem %s7, %s373
      // Predicated region
      $region49: #{qnetwork_forward.1} parent=47 // pred_check
        %p375 = pneg %p188
      $region50: #{qnetwork_forward.1} parent=47 // pred_check_branch
        %377 = sbr.rel (%p375) target = $region52
      $region51: #{qnetwork_forward.1} parent=47 // pred_region
        _
      $region52: #{qnetwork_forward.1} parent=47 // pred_fallthru
        _
    $region48: #{qnetwork_forward.1} parent=5 // pred_fallthru
      _
    %p378 = scmp.le.s32.totalorder 2, %s13
    // Predicated region
    $region53: #{qnetwork_forward.1} parent=5 // pred_check
      %p379 = pneg %p378
    $region54: #{qnetwork_forward.1} parent=5 // pred_check_branch
      %381 = sbr.rel (%p379) target = $region56
    $region55: #{qnetwork_forward.1} parent=5 // pred_region
      %s382 = ssub.s32 %s13, 2
      // Predicated region
      $region57: #{qnetwork_forward.1} parent=55 // pred_check
        %p383 = pneg %p194
      $region58: #{qnetwork_forward.1} parent=55 // pred_check_branch
        %385 = sbr.rel (%p383) target = $region60
      $region59: #{qnetwork_forward.1} parent=55 // pred_region
        %p386 = scmp.lt.s32.totalorder %s19, 1
        %s387 = scalar_select %p386, %s19, 1
        %s388 = smul.addr %s387, 8
        %s389 = scalar_lea.vmem %s7, %s388
      $region60: #{qnetwork_forward.1} parent=55 // pred_fallthru
        _
    $region56: #{qnetwork_forward.1} parent=5 // pred_fallthru
      _
  $region6: #{qnetwork_forward.1} parent=0 // loop_footer
    %s17 = sadd.s32 1, %s13
  $region7: #{qnetwork_forward.1} parent=0 // loop_footer_branch
    %12 = sbr.rel target = $region3
  $region8: #{qnetwork_forward.1} parent=0 // loop_exit
    _

</llo_original>
